<compile_context>
chip_gen: v6e
topology: v6e:2x2x1
jax: 0.10.0
libtpu: 0.0.40
codegen_flags: <defaults>
</compile_context>

<pallas_src>
import jax
import jax.numpy as jnp
from jax.experimental import pallas as pl
from jax.experimental.pallas import tpu as pltpu


_MASK_VAL = -1e30  # finite "-inf": exp() underflows to 0 without NaN risk


def _round_up(x, m):
    return (x + m - 1) // m * m


def _make_kernel(C, n_true, nt, n_pad):
    """Build the per-(batch, N-tile) online softmax-pooling kernel."""
    need_mask = n_pad != n_true

    def kernel(x_ref, w_ref, o_ref, m_sc, l_sc, acc_sc):
        j = pl.program_id(1)

        @pl.when(j == 0)
        def _init():
            m_sc[...] = jnp.full_like(m_sc, _MASK_VAL)
            l_sc[...] = jnp.zeros_like(l_sc)
            acc_sc[...] = jnp.zeros_like(acc_sc)

        xb = x_ref[0]                                          # (C, nt)

        # Fused Wf / Wphi 1x1x1 convs: one MXU matmul, f32 accumulation.
        fp = jnp.dot(w_ref[...], xb,
                     preferred_element_type=jnp.float32)       # (2C, nt)
        f = fp[:C, :]                                          # (C, nt)
        phi = fp[C:, :]                                        # (C, nt)

        if need_mask:
            # Columns >= n_true are zero padding; exclude them from the
            # softmax.  phi needs no mask: padded x columns give phi == 0 and
            # their softmax weight exp(_MASK_VAL - m) is exactly 0.
            col = j * nt + jax.lax.broadcasted_iota(jnp.int32, (C, nt), 1)
            f = jnp.where(col < n_true, f, _MASK_VAL)

        # Online (streaming) softmax-weighted pooling update.
        m_new = jnp.maximum(m_sc[...], jnp.max(f, axis=1, keepdims=True))  # (C,1)
        alpha = jnp.exp(m_sc[...] - m_new)                                 # (C,1)
        e = jnp.exp(f - m_new)                                             # (C,nt)
        l_sc[...] = alpha * l_sc[...] + jnp.sum(e, axis=1, keepdims=True)
        acc_sc[...] = alpha * acc_sc[...] + jnp.sum(e * phi, axis=1,
                                                    keepdims=True)
        m_sc[...] = m_new

        @pl.when(j == pl.num_programs(1) - 1)
        def _finalize():
            s_col = acc_sc[...] / l_sc[...]                                # (C,1)
            # (C,1) sublane column -> lane-dense (1,C) row without a hardware
            # transpose/relayout: place the per-channel scalars on the
            # diagonal of a (C,C) tile and reduce over sublanes (tiny, once
            # per batch).
            rows = jax.lax.broadcasted_iota(jnp.int32, (C, C), 0)
            cols = jax.lax.broadcasted_iota(jnp.int32, (C, C), 1)
            eye = (rows == cols).astype(jnp.float32)                       # (C,C)
            o_ref[0] = jnp.sum(s_col * eye, axis=0, keepdims=True)         # (1,C)

    return kernel


def self_attention_3d(x, wf, bf, wphi, bphi, wv, bv, *,
                      compute_dtype=jnp.bfloat16, lane_tile=None):
    """SelfAttention3D forward.

    x: (B, C, D, H, W); wf/wphi/wv: (C, C) 1x1x1 conv weights; b*: (C,).
    Returns (B, C, 1, 1, 1) attention map matching the PyTorch module.
    Note: bf is accepted for API parity but is a mathematical no-op
    (softmax over N is invariant to a per-channel constant).
    """
    del bf  # softmax-invariant; see note above
    B, C, D, H, W = x.shape
    N = D * H * W
    compute_dtype = jnp.dtype(compute_dtype)

    # N-tile sizing: keep double-buffered x tiles + f32 temps under ~8 MiB
    # (fits v5e 16 MiB scoped default; well under v7x 64 MiB physical VMEM).
    # If profiling ever shows exposed DMA, the x spec can additionally take
    # pipeline_mode=pl.Buffered(3).
    if lane_tile is None:
        bytes_per_col = C * (2 * compute_dtype.itemsize + 4 * 4)
        lane_tile = max(128, min(4096, ((8 << 20) // bytes_per_col) // 128 * 128))
    nt = min(lane_tile, _round_up(N, 128))
    n_pad = _round_up(N, nt)
    n_tiles = n_pad // nt

    x2 = x.reshape(B, C, N)
    if n_pad != N:
        x2 = jnp.pad(x2, ((0, 0), (0, 0), (0, n_pad - N)))
    x2 = x2.astype(compute_dtype)

    # Fuse Wf / Wphi into a single (2C, C) matmul operand.
    w_stack = jnp.concatenate([wf, wphi], axis=0).astype(compute_dtype)

    pooled = pl.pallas_call(
        _make_kernel(C, N, nt, n_pad),
        out_shape=jax.ShapeDtypeStruct((B, 1, C), jnp.float32),
        grid=(B, n_tiles),
        in_specs=[
            pl.BlockSpec((1, C, nt), lambda b, j: (b, 0, j)),   # x stream
            pl.BlockSpec((2 * C, C), lambda b, j: (0, 0)),      # stacked Wf/Wphi
        ],
        out_specs=pl.BlockSpec((1, 1, C), lambda b, j: (b, 0, 0)),
        scratch_shapes=[
            pltpu.VMEM((C, 1), jnp.float32),   # running max       m
            pltpu.VMEM((C, 1), jnp.float32),   # running denom     l
            pltpu.VMEM((C, 1), jnp.float32),   # running numerator acc
        ],
        compiler_params=pltpu.CompilerParams(
            dimension_semantics=("parallel", "arbitrary")),
    )(x2, w_stack)

    # Epilogue (tiny, batched over B) in plain JAX:
    #   s = sum_N(eta * (Wphi x + bphi)) = pooled + bphi   (since sum_N eta == 1)
    #   out = sigmoid(Wv s + bv)
    s = pooled.reshape(B, C) + bphi[None, :].astype(jnp.float32)           # (B, C)
    v = s @ wv.astype(jnp.float32).T + bv[None, :].astype(jnp.float32)     # (B, C)
    return jax.nn.sigmoid(v).reshape(B, C, 1, 1, 1)


def _reference(x, wf, bf, wphi, bphi, wv, bv):
    """Pure-JAX (f32) reference mirroring the PyTorch forward exactly."""
    B, C, D, H, W = x.shape
    N = D * H * W
    hp = jax.lax.Precision.HIGHEST
    xf = x.reshape(B, C, N).astype(jnp.float32)
    f = jnp.einsum("oc,bcn->bon", wf, xf, precision=hp) + bf[None, :, None]
    phi = jnp.einsum("oc,bcn->bon", wphi, xf, precision=hp) + bphi[None, :, None]
    eta = jax.nn.softmax(f, axis=2)
    s = jnp.sum(eta * phi, axis=2, keepdims=True)                 # (B, C, 1)
    v = jnp.einsum("oc,bcn->bon", wv, s, precision=hp) + bv[None, :, None]
    return jax.nn.sigmoid(v).reshape(B, C, 1, 1, 1)


if __name__ == "__main__":
    def _params(key, C):
        kwf, kbf, kwphi, kbphi, kwv, kbv = jax.random.split(key, 6)
        return (0.3 * jax.random.normal(kwf, (C, C), dtype=jnp.float32),
                0.1 * jax.random.normal(kbf, (C,), dtype=jnp.float32),
                0.3 * jax.random.normal(kwphi, (C, C), dtype=jnp.float32),
                0.1 * jax.random.normal(kbphi, (C,), dtype=jnp.float32),
                0.3 * jax.random.normal(kwv, (C, C), dtype=jnp.float32),
                0.1 * jax.random.normal(kbv, (C,), dtype=jnp.float32))

    root = jax.random.PRNGKey(0)
    k1, k2, kx1, kx2 = jax.random.split(root, 4)

    # Config 1: small shapes from the module spec (single padded N tile).
    B, C, D, H, W = 2, 4, 4, 4, 4
    x = jax.random.normal(kx1, (B, C, D, H, W), dtype=jnp.float32)
    p = _params(k1, C)
    ref = _reference(x, *p)

    out = jax.block_until_ready(self_attention_3d(x, *p))          # bf16 stream
    assert out.shape == (B, C, 1, 1, 1), out.shape
    assert jnp.allclose(out, ref, atol=3e-2, rtol=3e-2), "bf16 mismatch (cfg1)"

    out32 = jax.block_until_ready(
        self_attention_3d(x, *p, compute_dtype=jnp.float32))
    # (tolerance allows for possible reduced-precision MXU passes on f32)
    assert jnp.allclose(out32, ref, atol=1e-2, rtol=1e-2), "f32 mismatch (cfg1)"

    # Config 2: multiple N tiles + a partially masked last tile
    # (C=8, N = 6*6*9 = 324 -> padded to 384, lane_tile=128 -> 3 tiles).
    B2, C2, D2, H2, W2 = 2, 8, 6, 6, 9
    x2 = jax.random.normal(kx2, (B2, C2, D2, H2, W2), dtype=jnp.float32)
    p2 = _params(k2, C2)
    ref2 = _reference(x2, *p2)

    out2 = jax.block_until_ready(self_attention_3d(x2, *p2, lane_tile=128))
    assert out2.shape == (B2, C2, 1, 1, 1), out2.shape
    assert jnp.allclose(out2, ref2, atol=3e-2, rtol=3e-2), "bf16 mismatch (cfg2)"

    out2_32 = jax.block_until_ready(
        self_attention_3d(x2, *p2, compute_dtype=jnp.float32, lane_tile=128))
    assert jnp.allclose(out2_32, ref2, atol=1e-2, rtol=1e-2), "f32 mismatch (cfg2)"

    print("KERNEL_OK")
</pallas_src>

<mosaic_0001>
module attributes {stable_mosaic.version = 11 : i64} {
  func.func @kernel(%arg0: i32, %arg1: i32, %arg2: memref<1x4x128xbf16, #tpu.memory_space<vmem>>, %arg3: memref<8x4xbf16, #tpu.memory_space<vmem>>, %arg4: memref<1x1x4xf32, #tpu.memory_space<vmem>>, %arg5: memref<4x1xf32, #tpu.memory_space<vmem>>, %arg6: memref<4x1xf32, #tpu.memory_space<vmem>>, %arg7: memref<4x1xf32, #tpu.memory_space<vmem>>) attributes {dimension_semantics = [#tpu.dimension_semantics<parallel>, #tpu.dimension_semantics<arbitrary>], iteration_bounds = array<i64: 2, 1>, scalar_prefetch = 0 : i64, scratch_operands = 3 : i64, tpu.core_type = #tpu.core_type<tc>, window_params = [{transform_indices = @transform_0, window_bounds = array<i64: 1, 4, 128>}, {pipeline_mode = #tpu.pipeline_mode<synchronous>, transform_indices = @transform_1, window_bounds = array<i64: 8, 4>}, {transform_indices = @transform_2, window_bounds = array<i64: 1, 1, 4>}]} {
    %c0_i32 = arith.constant 0 : i32
    %0 = arith.cmpi eq, %arg1, %c0_i32 : i32
    %1 = arith.extui %0 : i1 to i32
    %c0_i32_0 = arith.constant 0 : i32
    %2 = arith.cmpi ne, %1, %c0_i32_0 : i32
    scf.if %2 {
      %cst_25 = arith.constant -1.000000e+30 : f32
      %44 = vector.broadcast %cst_25 : f32 to vector<4x1xf32>
      %c0_26 = arith.constant 0 : index
      %c0_27 = arith.constant 0 : index
      %45 = vector.load %arg5[%c0_26, %c0_27] : memref<4x1xf32, #tpu.memory_space<vmem>>, vector<4x1xf32>
      tpu.vector_store %arg5[%c0_26, %c0_27], %44 {strides = array<i32>} : memref<4x1xf32, #tpu.memory_space<vmem>>, vector<4x1xf32>,
      %cst_28 = arith.constant 0.000000e+00 : f32
      %46 = vector.broadcast %cst_28 : f32 to vector<4x1xf32>
      %c0_29 = arith.constant 0 : index
      %c0_30 = arith.constant 0 : index
      %47 = vector.load %arg6[%c0_29, %c0_30] : memref<4x1xf32, #tpu.memory_space<vmem>>, vector<4x1xf32>
      tpu.vector_store %arg6[%c0_29, %c0_30], %46 {strides = array<i32>} : memref<4x1xf32, #tpu.memory_space<vmem>>, vector<4x1xf32>,
      %cst_31 = arith.constant 0.000000e+00 : f32
      %48 = vector.broadcast %cst_31 : f32 to vector<4x1xf32>
      %c0_32 = arith.constant 0 : index
      %c0_33 = arith.constant 0 : index
      %49 = vector.load %arg7[%c0_32, %c0_33] : memref<4x1xf32, #tpu.memory_space<vmem>>, vector<4x1xf32>
      tpu.vector_store %arg7[%c0_32, %c0_33], %48 {strides = array<i32>} : memref<4x1xf32, #tpu.memory_space<vmem>>, vector<4x1xf32>,
    } else {
    }
    %c0 = arith.constant 0 : index
    %c0_1 = arith.constant 0 : index
    %c0_2 = arith.constant 0 : index
    %3 = vector.load %arg2[%c0, %c0_1, %c0_2] : memref<1x4x128xbf16, #tpu.memory_space<vmem>>, vector<1x4x128xbf16>
    %4 = vector.shape_cast %3 : vector<1x4x128xbf16> to vector<4x128xbf16>
    %c0_3 = arith.constant 0 : index
    %c0_4 = arith.constant 0 : index
    %5 = vector.load %arg3[%c0_3, %c0_4] : memref<8x4xbf16, #tpu.memory_space<vmem>>, vector<8x4xbf16>
    %cst = arith.constant dense<0.000000e+00> : vector<8x128xf32>
    %6 = tpu.matmul %5, %4, %cst {dimension_numbers = #tpu.dot_dimension_numbers<[1], [0], [0], [1], [0, 0, 1, 1], [], []>} : vector<8x4xbf16>, vector<4x128xbf16>, vector<8x128xf32> -> vector<8x128xf32>
    %7 = vector.extract_strided_slice %6 {offsets = [0, 0], sizes = [4, 128], strides = [1, 1]} : vector<8x128xf32> to vector<4x128xf32>
    %8 = vector.extract_strided_slice %6 {offsets = [4, 0], sizes = [4, 128], strides = [1, 1]} : vector<8x128xf32> to vector<4x128xf32>
    %c128_i32 = arith.constant 128 : i32
    %9 = arith.muli %arg1, %c128_i32 : i32
    %10 = tpu.iota {dimensions = array<i32: 1>} : vector<4x128xi32>
    %11 = vector.broadcast %9 : i32 to vector<4x128xi32>
    %12 = arith.addi %11, %10 : vector<4x128xi32>
    %c64_i32 = arith.constant 64 : i32
    %13 = vector.broadcast %c64_i32 : i32 to vector<4x128xi32>
    %14 = arith.cmpi slt, %12, %13 : vector<4x128xi32>
    %cst_5 = arith.constant -1.000000e+30 : f32
    %15 = vector.broadcast %cst_5 : f32 to vector<4x128xf32>
    %16 = arith.select %14, %7, %15 : vector<4x128xi1>, vector<4x128xf32>
    %c0_6 = arith.constant 0 : index
    %c0_7 = arith.constant 0 : index
    %17 = vector.load %arg5[%c0_6, %c0_7] : memref<4x1xf32, #tpu.memory_space<vmem>>, vector<4x1xf32>
    %cst_8 = arith.constant dense<0xFF800000> : vector<4xf32>
    %18 = vector.multi_reduction <maximumf>, %16, %cst_8 [1] : vector<4x128xf32> to vector<4xf32>
    %19 = vector.shape_cast %18 : vector<4xf32> to vector<4x1xf32>
    %20 = arith.maximumf %17, %19 : vector<4x1xf32>
    %c0_9 = arith.constant 0 : index
    %c0_10 = arith.constant 0 : index
    %21 = vector.load %arg5[%c0_9, %c0_10] : memref<4x1xf32, #tpu.memory_space<vmem>>, vector<4x1xf32>
    %22 = arith.subf %21, %20 : vector<4x1xf32>
    %23 = math.exp %22 : vector<4x1xf32>
    %24 = vector.broadcast %20 : vector<4x1xf32> to vector<4x128xf32>
    %25 = arith.subf %16, %24 : vector<4x128xf32>
    %26 = math.exp %25 : vector<4x128xf32>
    %c0_11 = arith.constant 0 : index
    %c0_12 = arith.constant 0 : index
    %27 = vector.load %arg6[%c0_11, %c0_12] : memref<4x1xf32, #tpu.memory_space<vmem>>, vector<4x1xf32>
    %28 = arith.mulf %23, %27 : vector<4x1xf32>
    %cst_13 = arith.constant dense<0.000000e+00> : vector<4xf32>
    %29 = vector.multi_reduction <add>, %26, %cst_13 [1] : vector<4x128xf32> to vector<4xf32>
    %30 = vector.shape_cast %29 : vector<4xf32> to vector<4x1xf32>
    %31 = arith.addf %28, %30 : vector<4x1xf32>
    %c0_14 = arith.constant 0 : index
    %c0_15 = arith.constant 0 : index
    %32 = vector.load %arg6[%c0_14, %c0_15] : memref<4x1xf32, #tpu.memory_space<vmem>>, vector<4x1xf32>
    tpu.vector_store %arg6[%c0_14, %c0_15], %31 {strides = array<i32>} : memref<4x1xf32, #tpu.memory_space<vmem>>, vector<4x1xf32>,
    %c0_16 = arith.constant 0 : index
    %c0_17 = arith.constant 0 : index
    %33 = vector.load %arg7[%c0_16, %c0_17] : memref<4x1xf32, #tpu.memory_space<vmem>>, vector<4x1xf32>
    %34 = arith.mulf %23, %33 : vector<4x1xf32>
    %35 = arith.mulf %26, %8 : vector<4x128xf32>
    %cst_18 = arith.constant dense<0.000000e+00> : vector<4xf32>
    %36 = vector.multi_reduction <add>, %35, %cst_18 [1] : vector<4x128xf32> to vector<4xf32>
    %37 = vector.shape_cast %36 : vector<4xf32> to vector<4x1xf32>
    %38 = arith.addf %34, %37 : vector<4x1xf32>
    %c0_19 = arith.constant 0 : index
    %c0_20 = arith.constant 0 : index
    %39 = vector.load %arg7[%c0_19, %c0_20] : memref<4x1xf32, #tpu.memory_space<vmem>>, vector<4x1xf32>
    tpu.vector_store %arg7[%c0_19, %c0_20], %38 {strides = array<i32>} : memref<4x1xf32, #tpu.memory_space<vmem>>, vector<4x1xf32>,
    %c0_21 = arith.constant 0 : index
    %c0_22 = arith.constant 0 : index
    %40 = vector.load %arg5[%c0_21, %c0_22] : memref<4x1xf32, #tpu.memory_space<vmem>>, vector<4x1xf32>
    tpu.vector_store %arg5[%c0_21, %c0_22], %20 {strides = array<i32>} : memref<4x1xf32, #tpu.memory_space<vmem>>, vector<4x1xf32>,
    %c0_i32_23 = arith.constant 0 : i32
    %41 = arith.cmpi eq, %arg1, %c0_i32_23 : i32
    %42 = arith.extui %41 : i1 to i32
    %c0_i32_24 = arith.constant 0 : i32
    %43 = arith.cmpi ne, %42, %c0_i32_24 : i32
    scf.if %43 {
      %c0_25 = arith.constant 0 : index
      %c0_26 = arith.constant 0 : index
      %44 = vector.load %arg7[%c0_25, %c0_26] : memref<4x1xf32, #tpu.memory_space<vmem>>, vector<4x1xf32>
      %c0_27 = arith.constant 0 : index
      %c0_28 = arith.constant 0 : index
      %45 = vector.load %arg6[%c0_27, %c0_28] : memref<4x1xf32, #tpu.memory_space<vmem>>, vector<4x1xf32>
      %46 = arith.divf %44, %45 : vector<4x1xf32>
      %47 = tpu.iota {dimensions = array<i32: 0>} : vector<4x4xi32>
      %48 = tpu.iota {dimensions = array<i32: 1>} : vector<4x4xi32>
      %49 = arith.cmpi eq, %47, %48 : vector<4x4xi32>
      %50 = arith.extui %49 : vector<4x4xi1> to vector<4x4xi32>
      %51 = arith.sitofp %50 : vector<4x4xi32> to vector<4x4xf32>
      %52 = vector.broadcast %46 : vector<4x1xf32> to vector<4x4xf32>
      %53 = arith.mulf %52, %51 : vector<4x4xf32>
      %cst_29 = arith.constant dense<0.000000e+00> : vector<4xf32>
      %54 = vector.multi_reduction <add>, %53, %cst_29 [0] : vector<4x4xf32> to vector<4xf32>
      %55 = vector.shape_cast %54 : vector<4xf32> to vector<1x4xf32>
      %c0_30 = arith.constant 0 : index
      %c0_31 = arith.constant 0 : index
      %c0_32 = arith.constant 0 : index
      %56 = vector.load %arg4[%c0_30, %c0_31, %c0_32] : memref<1x1x4xf32, #tpu.memory_space<vmem>>, vector<1x1x4xf32>
      %57 = vector.shape_cast %56 : vector<1x1x4xf32> to vector<1x4xf32>
      %58 = vector.shape_cast %55 : vector<1x4xf32> to vector<1x1x4xf32>
      tpu.vector_store %arg4[%c0_30, %c0_31, %c0_32], %58 {strides = array<i32>} : memref<1x1x4xf32, #tpu.memory_space<vmem>>, vector<1x1x4xf32>,
    } else {
    }
    return
  }
  func.func @transform_0(%arg0: i32, %arg1: i32) -> (i32, i32, i32) {
    %c0_i32 = arith.constant 0 : i32
    %c0_i32_0 = arith.constant 0 : i32
    return %arg0, %c0_i32, %arg1 : i32, i32, i32
  }
  func.func @transform_1(%arg0: i32, %arg1: i32) -> (i32, i32) {
    %c0_i32 = arith.constant 0 : i32
    %c0_i32_0 = arith.constant 0 : i32
    %c0_i32_1 = arith.constant 0 : i32
    return %c0_i32, %c0_i32_0 : i32, i32
  }
  func.func @transform_2(%arg0: i32, %arg1: i32) -> (i32, i32, i32) {
    %c0_i32 = arith.constant 0 : i32
    %c0_i32_0 = arith.constant 0 : i32
    %c0_i32_1 = arith.constant 0 : i32
    return %arg0, %c0_i32, %c0_i32_0 : i32, i32, i32
  }
}

</mosaic_0001>

<llo_original>
// kernel: tpu_custom_call.1
$region0: #{tpu_custom_call.1}
  #allocation0 [shape = 'u32[]', space=smem, size = 0x4, offset = 0x4, fixed_abs, tag = 'smem constant byte address 0x4 - core index']
  #allocation1 [shape = 'u32[144,128]{1,0:T(1,128)}', space=vmem, size = 0x12000, scoped, tag = 'internal scratch']
  #allocation2 [shape = 'f32[4,1]{1,0:T(4,128)}', space=vmem, size = 0x800, scoped, tag = 'scratch operand']
  #allocation3 [shape = 'f32[4,1]{1,0:T(4,128)}', space=vmem, size = 0x800, scoped, tag = 'scratch operand']
  #allocation4 [shape = 'f32[4,1]{1,0:T(4,128)}', space=vmem, size = 0x800, scoped, tag = 'scratch operand']
  %s0 = inlined_call_operand.vmem [shape: bf16[2,4,128], index: 0, kind: input, shape index: {}]
  %s1 = inlined_call_operand.vmem [shape: bf16[8,4], index: 1, kind: input, shape index: {}]
  %s2 = inlined_call_operand.hbm [shape: f32[2,1,4], index: 2, kind: output, shape index: {}]
  %s3 = sld [smem:[#allocation0]]
  $region49: #{tpu_custom_call.1} parent=0
    _
  %s5 = ssub.s32 1, %s3
  %s6 = scalar_select 0, %s5, %s3
  $region1: #{tpu_custom_call.1} parent=0
    #allocation5 [shape = 'u8[1024]{0}', space=vmem, size = 0x400, scoped, tag = 'output window, operand 0']
    #allocation6 [shape = 's32[2]{0}', space=sflag, size = 0x8, scoped, tag = 'scoped memory for tpu_custom_call.1']
    %7 = vsyncpa [#allocation6], 0
    %s8 = scalar_lea.sflag [#allocation6], 1
    %9 = vsyncpa %s8, 0
    loop: start=0, step=1, limit=4
    $region2: #{tpu_custom_call.1} parent=1 // loop_pre_header
      _
    $region3: #{tpu_custom_call.1} parent=1 // loop_header
      %s11 = sphi 0, %s15
      %p12 = scmp.ge.s32.totalorder %s11, 4
      %s18 = sphi 0, %s30
      %s19 = sphi 0, %s26
      %s20 = sphi 0, %s18
      %s21 = sphi 0, %s19
      %s22 = sphi 0, %s20
      %s23 = sphi 0, %s21
      %s35 = sphi 0, %s37
      %s38 = sphi 0, %s35
      %s39 = sphi 0, %s38
      %s55 = sphi 0, %s39
      %s59 = sphi 0, %s59
      %s61 = sphi 0, %s59
      %s62 = sphi 0, %s61
      %s76 = sphi 0, %s62
      %s82 = sphi 0, %s84
      %s85 = sphi 0, %s82
      %s86 = sphi 0, %s85
      %s102 = sphi 0, %s86
    $region4: #{tpu_custom_call.1} parent=1 // loop_header_branch
      %14 = sbr.rel (%p12) target = $region8
    $region5: #{tpu_custom_call.1} parent=1 // loop_body
      %s16 = ssub.s32 %s11, 1
      %s17 = ssub.s32 %s11, 2
      %s24 = sadd.s32 1, %s19
      %p25 = scmp.ge.s32.totalorder %s24, 1
      %s26 = scalar_select %p25, 0, %s24
      %s27 = sadd.s32 1, %s18
      %s28 = scalar_select %p25, %s27, %s18
      %p29 = scmp.ge.s32.totalorder %s28, 2
      %s30 = scalar_select %p29, 0, %s28
      %s31 = ssub.s32 %s18, %s30
      %s32 = ssub.s32 %s19, %s26
      %s33 = sor.u32 %s31, %s32
      %p34 = scmp.eq.s32.totalorder %s33, 0
      %s36 = sadd.s32 %s35, 1
      %s37 = scalar_select %p34, %s35, %s36
      %p40 = pneg %p34
      %p41 = scmp.eq.s32.totalorder %s11, 1
      %p42 = por %p40, %p41
      %p43 = scmp.ne.s32.totalorder %s35, %s38
      %p44 = scmp.eq.s32.totalorder %s11, 0
      %p45 = por %p43, %p44
      %p46 = scmp.ne.s32.totalorder %s35, %s38
      %p47 = scmp.eq.s32.totalorder %s16, 1
      %p48 = por %p46, %p47
      %p49 = scmp.ne.s32.totalorder %s38, %s39
      %p50 = scmp.eq.s32.totalorder %s16, 0
      %p51 = por %p49, %p50
      %p52 = scmp.ne.s32.totalorder %s38, %s39
      %p53 = scmp.eq.s32.totalorder %s17, 1
      %p54 = por %p52, %p53
      %p56 = scmp.ne.s32.totalorder %s39, %s55
      %p57 = scmp.eq.s32.totalorder %s17, 0
      %p58 = por %p56, %p57
      %s60 = sadd.s32 %s59, 1
      %p63 = scmp.eq.s32.totalorder %s11, 1
      %p64 = scmp.ne.s32.totalorder %s59, %s61
      %p65 = scmp.eq.s32.totalorder %s11, 0
      %p66 = por %p64, %p65
      %p67 = scmp.ne.s32.totalorder %s59, %s61
      %p68 = scmp.eq.s32.totalorder %s16, 1
      %p69 = por %p67, %p68
      %p70 = scmp.ne.s32.totalorder %s61, %s62
      %p71 = scmp.eq.s32.totalorder %s16, 0
      %p72 = por %p70, %p71
      %p73 = scmp.ne.s32.totalorder %s61, %s62
      %p74 = scmp.eq.s32.totalorder %s17, 1
      %p75 = por %p73, %p74
      %p77 = scmp.ne.s32.totalorder %s62, %s76
      %p78 = scmp.eq.s32.totalorder %s17, 0
      %p79 = por %p77, %p78
      %s80 = ssub.s32 %s18, %s30
      %p81 = scmp.eq.s32.totalorder %s80, 0
      %s83 = sadd.s32 %s82, 1
      %s84 = scalar_select %p81, %s82, %s83
      %p87 = pneg %p81
      %p88 = scmp.eq.s32.totalorder %s11, 1
      %p89 = por %p87, %p88
      %p90 = scmp.ne.s32.totalorder %s82, %s85
      %p91 = scmp.eq.s32.totalorder %s11, 0
      %p92 = por %p90, %p91
      %p93 = scmp.ne.s32.totalorder %s82, %s85
      %p94 = scmp.eq.s32.totalorder %s16, 1
      %p95 = por %p93, %p94
      %p96 = scmp.ne.s32.totalorder %s85, %s86
      %p97 = scmp.eq.s32.totalorder %s16, 0
      %p98 = por %p96, %p97
      %p99 = scmp.ne.s32.totalorder %s85, %s86
      %p100 = scmp.eq.s32.totalorder %s17, 1
      %p101 = por %p99, %p100
      %p103 = scmp.ne.s32.totalorder %s86, %s102
      %p104 = scmp.eq.s32.totalorder %s17, 0
      %p105 = por %p103, %p104
      %p106 = scmp.le.s32.totalorder 1, %s11
      %p107 = scmp.lt.s32.totalorder %s11, 3
      %p108 = pnand %p106, %p107
      %p109 = pneg %p108
      // Predicated region
      $region9: #{tpu_custom_call.1} parent=5 // pred_check
        _
      $region10: #{tpu_custom_call.1} parent=5 // pred_check_branch
        %111 = sbr.rel (%p108) target = $region12
      $region11: #{tpu_custom_call.1} parent=5 // pred_region
        %s112 = ssub.s32 %s11, 1
        // Predicated region
        $region13: #{tpu_custom_call.1} parent=11 // pred_check
          %p113 = pneg %p72
        $region14: #{tpu_custom_call.1} parent=11 // pred_check_branch
          %115 = sbr.rel (%p113) target = $region16
        $region15: #{tpu_custom_call.1} parent=11 // pred_region
          _
        $region16: #{tpu_custom_call.1} parent=11 // pred_fallthru
          _
      $region12: #{tpu_custom_call.1} parent=5 // pred_fallthru
        _
      %p116 = scmp.lt.s32.totalorder %s11, 2
      // Predicated region
      $region17: #{tpu_custom_call.1} parent=5 // pred_check
        %p117 = pneg %p116
      $region18: #{tpu_custom_call.1} parent=5 // pred_check_branch
        %119 = sbr.rel (%p117) target = $region20
      $region19: #{tpu_custom_call.1} parent=5 // pred_region
        // Predicated region
        $region21: #{tpu_custom_call.1} parent=19 // pred_check
          %p120 = pneg %p45
        $region22: #{tpu_custom_call.1} parent=19 // pred_check_branch
          %122 = sbr.rel (%p120) target = $region24
        $region23: #{tpu_custom_call.1} parent=19 // pred_region
          %p123 = scmp.lt.s32.totalorder %s18, 1
          %s124 = scalar_select %p123, %s18, 1
          %p125 = scmp.lt.s32.totalorder %s19, 0
          %s126 = scalar_select %p125, %s19, 0
          %s127 = sadd.s32 %s126, %s124
          %s128 = smul.addr %s127, 2
          %s129 = scalar_lea.vmem %s0, %s128
        $region24: #{tpu_custom_call.1} parent=19 // pred_fallthru
          _
      $region20: #{tpu_custom_call.1} parent=5 // pred_fallthru
        _
      %p130 = scmp.le.s32.totalorder 1, %s11
      %p131 = scmp.lt.s32.totalorder %s11, 3
      %p132 = pnand %p130, %p131
      %p133 = pneg %p132
      // Predicated region
      $region25: #{tpu_custom_call.1} parent=5 // pred_check
        _
      $region26: #{tpu_custom_call.1} parent=5 // pred_check_branch
        %135 = sbr.rel (%p132) target = $region28
      $region27: #{tpu_custom_call.1} parent=5 // pred_region
        %s136 = ssub.s32 %s11, 1
        %p137 = scmp.lt.s32.totalorder %s20, 1
        %s138 = scalar_select %p137, %s20, 1
        %p139 = scmp.lt.s32.totalorder %s21, 0
        %s140 = scalar_select %p139, %s21, 0
        %s141 = sadd.s32 %s140, %s138
        %s142 = smul.addr %s141, 2
        %s143 = scalar_lea.vmem %s0, %s142
        %p144 = pneg %p51
        %p145 = pneg %p48
        %p146 = pneg %p72
        %p147 = pneg %p69
        %p148 = pneg %p98
        %p149 = pneg %p95
        %s150 = sand.u32 %s85, 1
        %s151 = scalar_lea.sflag [#allocation6], %s150
        %s152 = sand.u32 %s85, 1
        %s153 = scalar_lea.vmem [#allocation5], %s152
        %p154 = scmp.lt.s32.totalorder %s20, 1
        %s155 = scalar_select %p154, %s20, 1
        %p156 = scmp.lt.s32.totalorder %s21, 0
        %s157 = scalar_select %p156, %s21, 0
        %s158 = sadd.s32 %s157, %s155
        %s159 = smul.addr %s158, 2
        %s160 = scalar_lea.vmem %s0, %s159
        %p162 = scmp.eq.s32.totalorder %s21, 0
        // Predicated region
        $region29: #{tpu_custom_call.1} parent=27 // pred_check
          %p163 = pneg %p162
        $region30: #{tpu_custom_call.1} parent=27 // pred_check_branch
          %165 = sbr.rel (%p163) target = $region32
        $region31: #{tpu_custom_call.1} parent=27 // pred_region
          %vm166 = vcmask 3072
          %167 = vst.msk [vmem:[#allocation2] sm:$0xf] %vm166, -1e+30
          %168 = vst.msk [vmem:[#allocation3] sm:$0xf] %vm166, 0.0
          %169 = vst.msk [vmem:[#allocation4] sm:$0xf] %vm166, 0.0
        $region32: #{tpu_custom_call.1} parent=27 // pred_fallthru
          _
        %v170 = vld [vmem:[%s160] sm:$0x3]
        %v171 = vld [vmem:[%s1] sm:$0xf]
        %vm172 = vcmask 31744
        %v174 = vsel %vm172, %v171, 0
        %vm176 = vcmask 1041408
        %v178 = vsel %vm176, %v170, 0
        %180 = vmatprep.subr.bf16.mxu0 0
        %181 = vmatpush1.bf16.msra.mxu0 0
        %182 = vmatprep.subr.bf16.mxu0 0
        %183 = vmatpush1.bf16.msra.mxu0 0
        %184 = vmatprep.subr.bf16.mxu0 0
        %185 = vmatpush1.bf16.msra.mxu0 0
        %186 = vmatprep.subr.bf16.mxu0 0
        %187 = vmatpush1.bf16.msra.mxu0 0
        %188 = vmatprep.subr.bf16.mxu0 0
        %189 = vmatpush1.bf16.msra.mxu0 0
        %190 = vmatprep.subr.bf16.mxu0 0
        %191 = vmatpush1.bf16.msra.mxu0 0
        %192 = vmatprep.subr.bf16.mxu0 0
        %193 = vmatpush1.bf16.msra.mxu0 0
        %194 = vmatprep.subr.bf16.mxu0 0
        %195 = vmatpush1.bf16.msra.mxu0 %v178
        %196 = vmatprep.subr.bf16.mxu0 0
        %197 = vmatpush2.bf16.msra.mxu0 0
        %198 = vmatprep.subr.bf16.mxu0 0
        %199 = vmatpush2.bf16.msra.mxu0 0
        %200 = vmatprep.subr.bf16.mxu0 0
        %201 = vmatpush2.bf16.msra.mxu0 0
        %202 = vmatprep.subr.bf16.mxu0 0
        %203 = vmatpush2.bf16.msra.mxu0 0
        %204 = vmatprep.subr.bf16.mxu0 0
        %205 = vmatpush2.bf16.msra.mxu0 0
        %206 = vmatprep.subr.bf16.mxu0 0
        %207 = vmatpush2.bf16.msra.mxu0 0
        %208 = vmatprep.subr.bf16.mxu0 0
        %209 = vmatpush2.bf16.msra.mxu0 0
        %210 = vmatprep.subr.bf16.mxu0 0
        %211 = vmatpush2.bf16.msra.mxu0 0
        %212 = vmatprep.mubr.bf16.mxu0 0
        %213 = vmatmul.mubr.bf16.gmra.mxu0 %v174
        %v214 = vpop.f32.mrf.mxu0
        %v215 = vadd.f32 0.0, %v214
        %v216 = vpop.f32.mrf.mxu0
        %v217 = vpop.f32.mrf.mxu0
        %v218 = vpop.f32.mrf.mxu0
        %219 = vdwg.mxu0
        %s220 = smul.u32 %s21, 128
        %v221 = vlaneseq
        %v222 = vand.u32 %v221, 127
        %v223 = vstv %s220
        %v224 = vadd.s32 %v223, %v222
        %vm225 = vcmp.lt.s32.totalorder %v224, 64
        %v226 = vsel %vm225, %v215, -1e+30
        %v227 = vld [vmem:[#allocation2] sm:$0xf]
        %vm228 = vcmask 1043456
        %v229 = vsel %vm228, %v226, -inf
        %230 = vmax.xlane.f32.xlu0 %v229
        %v231 = vpop.xlane.xlu0 %230
        %v232 = vmax.f32 %v227, %v231
        %v233 = vsub.f32 %v227, %v232
        %v234 = vmul.f32 %v233, 1.442695
        %v235 = vpow.pop %v234
        %237 = vset.pattern.permute.xlu0 0
        %238 = vperm.xlu0 %237, %v232
        %v239 = vpop.permute.xlu0 %238
        %v241 = vsub.f32 %v226, %v239
        %v242 = vmul.f32 %v241, 1.442695
        %v243 = vpow.pop %v242
        %v244 = vld [vmem:[#allocation3] sm:$0xf]
        %v245 = vmul.f32 %v235, %v244
        %v246 = vsel %vm228, %v243, 0.0
        %247 = vadd.xlane.f32.xlu0 %v246
        %v248 = vpop.xlane.xlu0 %247
        %v249 = vadd.f32 %v245, %v248
        %vm250 = vcmask 3072
        %251 = vst.msk [vmem:[#allocation3] sm:$0xf] %vm250, %v249
        %v252 = vld [vmem:[#allocation4] sm:$0xf]
        %v253 = vmul.f32 %v235, %v252
        %v255 = vrot.slane %v215, 4
        %v257 = vmul.f32 %v243, %v255
        %v258 = vsel %vm228, %v257, 0.0
        %259 = vadd.xlane.f32.xlu0 %v258
        %v260 = vpop.xlane.xlu0 %259
        %v261 = vadd.f32 %v253, %v260
        %262 = vst.msk [vmem:[#allocation4] sm:$0xf] %vm250, %v261
        %263 = vst.msk [vmem:[#allocation2] sm:$0xf] %vm250, %v232
        // Predicated region
        $region33: #{tpu_custom_call.1} parent=27 // pred_check
          %p264 = pneg %p162
        $region34: #{tpu_custom_call.1} parent=27 // pred_check_branch
          %266 = sbr.rel (%p264) target = $region36
        $region35: #{tpu_custom_call.1} parent=27 // pred_region
          %v267 = vld [vmem:[#allocation4] sm:$0xf]
          %v268 = vld [vmem:[#allocation3] sm:$0xf]
          %v269 = vrcp.pop %v268
          %v270 = vmul.f32 %v267, %v269
          %v271 = vlaneseq
          %v272 = vshrl.u32 %v271, 7
          %vm273 = vcmp.eq.s32.totalorder %v272, %v222
          %v274 = vsel %vm273, 1, 0
          %v275 = vcvt.s32.f32 %v274
          %277 = vset.pattern.permute.xlu0 0
          %278 = vperm.xlu0 %277, %v270
          %v279 = vpop.permute.xlu0 %278
          %v281 = vmul.f32 %v279, %v275
          %vm282 = vcmask 27648
          %v283 = vsel %vm282, %v281, 0.0
          %v284 = vrot.slane %v283, 4
          %v285 = vadd.f32 %v283, %v284
          %v286 = vrot.slane %v285, 2
          %v287 = vadd.f32 %v285, %v286
          %v288 = vrot.slane %v287, 1
          %v289 = vadd.f32 %v287, %v288
          %vm290 = vcmask 24576
          %291 = vst.msk [vmem:[%s153] sm:$0x1] %vm290, %v289
        $region36: #{tpu_custom_call.1} parent=27 // pred_fallthru
          _
        %s292 = sand.u32 %s85, 1
        %s293 = scalar_lea.sflag [#allocation6], %s292
        %s294 = sand.u32 %s85, 1
        %s295 = scalar_lea.vmem [#allocation5], %s294
        // Predicated region
        $region37: #{tpu_custom_call.1} parent=27 // pred_check
          %p296 = pneg %p95
        $region38: #{tpu_custom_call.1} parent=27 // pred_check_branch
          %298 = sbr.rel (%p296) target = $region40
        $region39: #{tpu_custom_call.1} parent=27 // pred_region
          %s300 = ssub.s32 16, 16
          %301 = vsyncadd %s293, %s300
          %s302 = smul.addr %s20, 16
          %s303 = scalar_lea.hbm %s2, %s302
          %s305 = sshll.u32 %s295, 4
          %s306 = int_to_ptr.vmem [resolvable:$true] %s305
          %308 = dma.vmem_to_hbm [thread:$0]  %s306, 16, %s303, %s293
        $region40: #{tpu_custom_call.1} parent=27 // pred_fallthru
          _
      $region28: #{tpu_custom_call.1} parent=5 // pred_fallthru
        _
      %p309 = scmp.le.s32.totalorder 2, %s11
      // Predicated region
      $region41: #{tpu_custom_call.1} parent=5 // pred_check
        %p310 = pneg %p309
      $region42: #{tpu_custom_call.1} parent=5 // pred_check_branch
        %312 = sbr.rel (%p310) target = $region44
      $region43: #{tpu_custom_call.1} parent=5 // pred_region
        %s313 = ssub.s32 %s11, 2
        // Predicated region
        $region45: #{tpu_custom_call.1} parent=43 // pred_check
          %p314 = pneg %p101
        $region46: #{tpu_custom_call.1} parent=43 // pred_check_branch
          %316 = sbr.rel (%p314) target = $region48
        $region47: #{tpu_custom_call.1} parent=43 // pred_region
          %s317 = sand.u32 %s86, 1
          %s318 = scalar_lea.sflag [#allocation6], %s317
          %s319 = sand.u32 %s86, 1
          %s320 = scalar_lea.vmem [#allocation5], %s319
          %321 = dma.done %s318, 16
        $region48: #{tpu_custom_call.1} parent=43 // pred_fallthru
          _
      $region44: #{tpu_custom_call.1} parent=5 // pred_fallthru
        _
    $region6: #{tpu_custom_call.1} parent=1 // loop_footer
      %s15 = sadd.s32 1, %s11
    $region7: #{tpu_custom_call.1} parent=1 // loop_footer_branch
      %10 = sbr.rel target = $region3
    $region8: #{tpu_custom_call.1} parent=1 // loop_exit
      _
    %322 = vsyncpa [#allocation6], 1
    %s323 = scalar_lea.sflag [#allocation6], 1
    %324 = vsyncpa %s323, 1

</llo_original>
